<compile_context>
chip_gen: v7x
topology: tpu7x:2x2x1
jax: 0.10.0
libtpu: 0.0.40
codegen_flags: <defaults>
</compile_context>

<pallas_src>
import functools
import math

import jax
import jax.numpy as jnp
from jax.experimental import pallas as pl
from jax.experimental.pallas import tpu as pltpu


# ----------------------------------------------------------------------------
# helpers
# ----------------------------------------------------------------------------
def _llama_d_ff(dim: int, multiple_of: int, ffn_dim_multiplier=None) -> int:
    d_ff = 4 * dim
    d_ff = int(2 * d_ff / 3)
    if ffn_dim_multiplier is not None:
        d_ff = int(d_ff * ffn_dim_multiplier)
    d_ff = multiple_of * ((d_ff + multiple_of - 1) // multiple_of)
    return d_ff


def _pick_tile(n: int, target: int, quantum: int) -> int:
    """Largest multiple of `quantum` that divides n and is <= min(target, n);
    falls back to the full dimension (always legal as a block size)."""
    t = (min(target, n) // quantum) * quantum
    while t >= quantum:
        if n % t == 0:
            return t
        t -= quantum
    return n


def apply_rope(x, cos, sin):
    """Interleaved-pair (complex) RoPE. x: (B, S, H, hd); cos/sin: (S, hd//2)."""
    B, S, H, hd = x.shape
    xr = x.astype(jnp.float32).reshape(B, S, H, hd // 2, 2)
    xe, xo = xr[..., 0], xr[..., 1]
    c = cos[None, :, None, :]
    s = sin[None, :, None, :]
    ye = xe * c - xo * s
    yo = xe * s + xo * c
    return jnp.stack([ye, yo], axis=-1).reshape(B, S, H, hd).astype(x.dtype)


# ----------------------------------------------------------------------------
# Fused RMSNorm + matmul (used for the fused QKV projection)
#   out = (RMSNorm(x) * norm_w) @ W      with W = [wq^T | wk^T | wv^T]
# Norm is computed once per token tile (at j == 0) into a VMEM scratch and
# re-used for every output-column tile -> the normed activations never hit HBM.
# ----------------------------------------------------------------------------
def _norm_matmul_kernel(x_ref, nw_ref, w_ref, o_ref, xn_ref, *, eps):
    j = pl.program_id(1)

    @pl.when(j == 0)
    def _():
        xf = x_ref[...].astype(jnp.float32)
        ms = jnp.mean(xf * xf, axis=-1, keepdims=True)
        xn = xf * jax.lax.rsqrt(ms + eps) * nw_ref[...].astype(jnp.float32)
        xn_ref[...] = xn.astype(xn_ref.dtype)

    o_ref[...] = jnp.dot(xn_ref[...], w_ref[...],
                         preferred_element_type=jnp.float32).astype(o_ref.dtype)


def rmsnorm_matmul(x, norm_w, w_t, *, eps, tm_target=256, tn_target=512):
    """x: (..., K); norm_w: (1, K); w_t: (K, N). Returns (..., N).

    Requires the full reduction dim K in VMEM per token tile (fine for LLaMA
    model dims up to several thousand)."""
    # TODO(synk): for very large model dims that do not fit a (tm, K) tile in
    # VMEM, fall back to a separate RMSNorm kernel + K-tiled matmul.
    orig = x.shape
    K = orig[-1]
    x2 = x.reshape(-1, K)
    T = x2.shape[0]
    N = w_t.shape[1]
    tm = _pick_tile(T, tm_target, 8)
    tn = _pick_tile(N, tn_target, 128)
    itemsize = jnp.dtype(x.dtype).itemsize
    cost = pl.CostEstimate(
        flops=int(2 * T * K * N),
        transcendentals=0,
        bytes_accessed=int((x2.size + w_t.size + T * N) * itemsize),
    )
    out = pl.pallas_call(
        functools.partial(_norm_matmul_kernel, eps=eps),
        out_shape=jax.ShapeDtypeStruct((T, N), x.dtype),
        grid_spec=pltpu.PrefetchScalarGridSpec(
            num_scalar_prefetch=0,
            grid=(T // tm, N // tn),
            in_specs=[
                pl.BlockSpec((tm, K), lambda i, j: (i, 0)),
                pl.BlockSpec((1, K), lambda i, j: (0, 0)),
                pl.BlockSpec((K, tn), lambda i, j: (0, j)),
            ],
            out_specs=pl.BlockSpec((tm, tn), lambda i, j: (i, j)),
            scratch_shapes=[pltpu.VMEM((tm, K), w_t.dtype)],
        ),
        compiler_params=pltpu.CompilerParams(
            dimension_semantics=("parallel", "arbitrary")),
        cost_estimate=cost,
    )(x2, norm_w, w_t)
    return out.reshape(*orig[:-1], N)


# ----------------------------------------------------------------------------
# Tiled matmul with fused residual add:  out = residual + x @ W
# (used for the attention output projection wo)
# ----------------------------------------------------------------------------
def _matmul_res_kernel_f32(res_ref, x_ref, w_ref, o_ref):
    # f32 output: accumulate directly into the (resident) output block.
    k = pl.program_id(2)

    @pl.when(k == 0)
    def _():
        o_ref[...] = res_ref[...].astype(jnp.float32)

    o_ref[...] += jnp.dot(x_ref[...], w_ref[...],
                          preferred_element_type=jnp.float32)


def _matmul_res_kernel_acc(res_ref, x_ref, w_ref, o_ref, acc_ref):
    # non-f32 output: keep an f32 accumulator scratch.
    k = pl.program_id(2)

    @pl.when(k == 0)
    def _():
        acc_ref[...] = res_ref[...].astype(jnp.float32)

    acc_ref[...] += jnp.dot(x_ref[...], w_ref[...],
                            preferred_element_type=jnp.float32)

    @pl.when(k == pl.num_programs(2) - 1)
    def _():
        o_ref[...] = acc_ref[...].astype(o_ref.dtype)


def linear_residual(residual, x, w_t, *, tm_target=256, tn_target=256,
                    tk_target=512):
    """residual: (..., N); x: (..., K); w_t: (K, N). Returns residual + x @ w_t."""
    orig = residual.shape
    K = x.shape[-1]
    N = w_t.shape[1]
    x2 = x.reshape(-1, K)
    r2 = residual.reshape(-1, N)
    M = x2.shape[0]
    tm = _pick_tile(M, tm_target, 8)
    tn = _pick_tile(N, tn_target, 128)
    tk = _pick_tile(K, tk_target, 128)

    in_specs = [
        pl.BlockSpec((tm, tn), lambda i, j, k: (i, j)),   # residual
        pl.BlockSpec((tm, tk), lambda i, j, k: (i, k)),   # activations
        pl.BlockSpec((tk, tn), lambda i, j, k: (k, j)),   # weight
    ]
    out_spec = pl.BlockSpec((tm, tn), lambda i, j, k: (i, j))
    common = dict(
        out_shape=jax.ShapeDtypeStruct((M, N), residual.dtype),
        compiler_params=pltpu.CompilerParams(
            dimension_semantics=("parallel", "parallel", "arbitrary")),
    )
    if residual.dtype == jnp.float32:
        out = pl.pallas_call(
            _matmul_res_kernel_f32,
            grid_spec=pltpu.PrefetchScalarGridSpec(
                num_scalar_prefetch=0, grid=(M // tm, N // tn, K // tk),
                in_specs=in_specs, out_specs=out_spec),
            **common,
        )(r2, x2, w_t)
    else:
        out = pl.pallas_call(
            _matmul_res_kernel_acc,
            grid_spec=pltpu.PrefetchScalarGridSpec(
                num_scalar_prefetch=0, grid=(M // tm, N // tn, K // tk),
                in_specs=in_specs, out_specs=out_spec,
                scratch_shapes=[pltpu.VMEM((tm, tn), jnp.float32)]),
            **common,
        )(r2, x2, w_t)
    return out.reshape(orig)


# ----------------------------------------------------------------------------
# GQA attention core (per batch, per query-head)
# ----------------------------------------------------------------------------
def _attn_kernel(q_ref, k_ref, v_ref, m_ref, o_ref, *, scale):
    q = q_ref[...].astype(jnp.float32) * scale       # (S, hd)
    k = k_ref[...].astype(jnp.float32)               # (L, hd)
    s = jax.lax.dot_general(q, k, (((1,), (1,)), ((), ())),
                            preferred_element_type=jnp.float32)          # (S, L)
    s = jnp.where(m_ref[...] == 0, jnp.float32(-1e30), s)
    s_max = jnp.max(s, axis=-1, keepdims=True)
    e = jnp.exp(s - s_max)
    p = e / jnp.sum(e, axis=-1, keepdims=True)
    o_ref[...] = jnp.dot(p.astype(v_ref.dtype), v_ref[...],
                         preferred_element_type=jnp.float32).astype(o_ref.dtype)


def gqa_attention(q, k, v, mask, *, n_rep, scale):
    """q: (B, Hq, S, hd); k, v: (B, Hkv, L, hd); mask: (S, L) with 1=keep, 0=mask."""
    # TODO(synk): single-shot (non-flash) attention core; fine for short L,
    # swap in an online-softmax KV-tiled variant for long sequences.
    B, Hq, S, hd = q.shape
    _, Hkv, L, _ = k.shape
    return pl.pallas_call(
        functools.partial(_attn_kernel, scale=scale),
        out_shape=jax.ShapeDtypeStruct((B, Hq, S, hd), q.dtype),
        grid_spec=pltpu.PrefetchScalarGridSpec(
            num_scalar_prefetch=0,
            grid=(B, Hq),
            in_specs=[
                pl.BlockSpec((None, None, S, hd), lambda b, h: (b, h, 0, 0)),
                pl.BlockSpec((None, None, L, hd), lambda b, h: (b, h // n_rep, 0, 0)),
                pl.BlockSpec((None, None, L, hd), lambda b, h: (b, h // n_rep, 0, 0)),
                pl.BlockSpec((S, L), lambda b, h: (0, 0)),
            ],
            out_specs=pl.BlockSpec((None, None, S, hd), lambda b, h: (b, h, 0, 0)),
        ),
        compiler_params=pltpu.CompilerParams(
            dimension_semantics=("parallel", "parallel")),
    )(q, k, v, mask)


# ----------------------------------------------------------------------------
# Fully fused FFN branch:
#   out = h + W2( silu(RMSNorm(h) W1^T) * (RMSNorm(h) W3^T) )
# Norm computed once per token tile (j == 0) into VMEM scratch; residual add
# fused into the accumulator init; W1^T|W3^T fused into one MXU stream.
# ----------------------------------------------------------------------------
def _ffn_kernel_f32(h_ref, nw_ref, w13_ref, w2_ref, o_ref, xn_ref, *, eps):
    # f32 output: accumulate directly into the (resident) output block.
    j = pl.program_id(1)

    @pl.when(j == 0)
    def _():
        hf = h_ref[...].astype(jnp.float32)
        ms = jnp.mean(hf * hf, axis=-1, keepdims=True)
        xn = hf * jax.lax.rsqrt(ms + eps) * nw_ref[...].astype(jnp.float32)
        xn_ref[...] = xn.astype(xn_ref.dtype)
        o_ref[...] = hf                               # fused residual init

    tf = w2_ref.shape[0]
    hh = jnp.dot(xn_ref[...], w13_ref[...], preferred_element_type=jnp.float32)
    h1 = hh[:, :tf]
    h3 = hh[:, tf:]
    gated = (h1 * jax.nn.sigmoid(h1)) * h3
    o_ref[...] += jnp.dot(gated.astype(w2_ref.dtype), w2_ref[...],
                          preferred_element_type=jnp.float32)


def _ffn_kernel_acc(h_ref, nw_ref, w13_ref, w2_ref, o_ref, xn_ref, acc_ref, *, eps):
    # non-f32 output: keep an f32 accumulator scratch.
    j = pl.program_id(1)

    @pl.when(j == 0)
    def _():
        hf = h_ref[...].astype(jnp.float32)
        ms = jnp.mean(hf * hf, axis=-1, keepdims=True)
        xn = hf * jax.lax.rsqrt(ms + eps) * nw_ref[...].astype(jnp.float32)
        xn_ref[...] = xn.astype(xn_ref.dtype)
        acc_ref[...] = hf

    tf = w2_ref.shape[0]
    hh = jnp.dot(xn_ref[...], w13_ref[...], preferred_element_type=jnp.float32)
    h1 = hh[:, :tf]
    h3 = hh[:, tf:]
    gated = (h1 * jax.nn.sigmoid(h1)) * h3
    acc_ref[...] += jnp.dot(gated.astype(w2_ref.dtype), w2_ref[...],
                            preferred_element_type=jnp.float32)

    @pl.when(j == pl.num_programs(1) - 1)
    def _():
        o_ref[...] = acc_ref[...].astype(o_ref.dtype)


def swiglu_ffn(h, norm_w, w13, w2_t, *, eps, tm_target=256):
    """h: (..., dim); norm_w: (1, dim); w13: (n_tiles, dim, 2*tf); w2_t: (d_ff, dim)."""
    orig = h.shape
    dim = orig[-1]
    n_tiles, _, two_tf = w13.shape
    tf = two_tf // 2
    d_ff = n_tiles * tf

    h2 = h.reshape(-1, dim)
    T = h2.shape[0]
    tm = _pick_tile(T, tm_target, 8)
    grid = (T // tm, n_tiles)                         # (token tiles, hidden tiles)

    in_specs = [
        pl.BlockSpec((tm, dim), lambda i, j: (i, 0)),               # h (residual + norm input)
        pl.BlockSpec((1, dim), lambda i, j: (0, 0)),                # ffn norm weight
        pl.BlockSpec((None, dim, two_tf), lambda i, j: (j, 0, 0)),  # fused W1^T|W3^T tile
        pl.BlockSpec((tf, dim), lambda i, j: (j, 0)),               # W2^T tile
    ]
    out_spec = pl.BlockSpec((tm, dim), lambda i, j: (i, 0))

    itemsize = jnp.dtype(h.dtype).itemsize
    witem = jnp.dtype(w13.dtype).itemsize
    # double-buffered inputs + resident normed-x scratch + output/accumulator
    work_set = (2 * itemsize * tm * dim
                + 2 * witem * (dim * two_tf + tf * dim)
                + witem * tm * dim
                + 8 * tm * dim)
    vmem_limit = int(min(64 * 2**20, max(32 * 2**20, 2 * work_set)))

    cost = pl.CostEstimate(
        flops=int(6 * T * dim * d_ff),
        transcendentals=int(T * d_ff),
        bytes_accessed=int((h2.size + w13.size + w2_t.size + T * dim) * itemsize),
    )
    common = dict(
        out_shape=jax.ShapeDtypeStruct((T, dim), h.dtype),
        compiler_params=pltpu.CompilerParams(
            dimension_semantics=("parallel", "arbitrary"),
            vmem_limit_bytes=vmem_limit),
        cost_estimate=cost,
    )

    if h.dtype == jnp.float32:
        out = pl.pallas_call(
            functools.partial(_ffn_kernel_f32, eps=eps),
            grid_spec=pltpu.PrefetchScalarGridSpec(
                num_scalar_prefetch=0, grid=grid,
                in_specs=in_specs, out_specs=out_spec,
                scratch_shapes=[pltpu.VMEM((tm, dim), w13.dtype)]),
            **common,
        )(h2, norm_w, w13, w2_t)
    else:
        out = pl.pallas_call(
            functools.partial(_ffn_kernel_acc, eps=eps),
            grid_spec=pltpu.PrefetchScalarGridSpec(
                num_scalar_prefetch=0, grid=grid,
                in_specs=in_specs, out_specs=out_spec,
                scratch_shapes=[pltpu.VMEM((tm, dim), w13.dtype),
                                pltpu.VMEM((tm, dim), jnp.float32)]),
            **common,
        )(h2, norm_w, w13, w2_t)
    return out.reshape(orig)


# ----------------------------------------------------------------------------
# Parameter packing (done ONCE at "model init": pre-transpose + fuse QKV / W1|W3)
# ----------------------------------------------------------------------------
def init_block_params(raw, *, n_heads, n_kv_heads, head_dim, eps, tf_target=512):
    dim = raw["wq"].shape[1]
    d_ff = raw["w1"].shape[0]
    tf = _pick_tile(d_ff, tf_target, 128)
    n_tiles = d_ff // tf
    w1t = raw["w1"].T                                   # (dim, d_ff)
    w3t = raw["w3"].T
    w13 = jnp.concatenate(
        [w1t.reshape(dim, n_tiles, tf).transpose(1, 0, 2),
         w3t.reshape(dim, n_tiles, tf).transpose(1, 0, 2)],
        axis=-1)                                        # (n_tiles, dim, 2*tf)
    wqkv_t = jnp.concatenate([raw["wq"].T, raw["wk"].T, raw["wv"].T], axis=1)
    return dict(
        n_heads=n_heads, n_kv_heads=n_kv_heads, head_dim=head_dim, eps=eps,
        attn_norm_w=raw["attn_norm_w"].reshape(1, dim),
        ffn_norm_w=raw["ffn_norm_w"].reshape(1, dim),
        wqkv_t=wqkv_t, wo_t=raw["wo"].T,
        w13=w13, w2_t=raw["w2"].T,
    )


# ----------------------------------------------------------------------------
# TransformerBlock forward (Pallas kernels + thin JAX glue)
# ----------------------------------------------------------------------------
def transformer_block_forward(x, p, start_pos, freqs_cos, freqs_sin, mask,
                              cache_k, cache_v):
    B, S, dim = x.shape
    hq, hkv, hd = p["n_heads"], p["n_kv_heads"], p["head_dim"]
    n_rep = hq // hkv
    nq, nk = hq * hd, hkv * hd

    # ---- attention branch: fused RMSNorm + QKV projection ------------------
    qkv = rmsnorm_matmul(x, p["attn_norm_w"], p["wqkv_t"], eps=p["eps"])
    q = qkv[..., :nq].reshape(B, S, hq, hd)
    k = qkv[..., nq:nq + nk].reshape(B, S, hkv, hd)
    v = qkv[..., nq + nk:].reshape(B, S, hkv, hd)

    # TODO(synk): RoPE, KV-cache scatter and head transposes are cheap
    # elementwise / data-movement glue kept in plain JAX.
    q = apply_rope(q, freqs_cos, freqs_sin)
    k = apply_rope(k, freqs_cos, freqs_sin)
    cache_k = jax.lax.dynamic_update_slice(cache_k, k.astype(cache_k.dtype),
                                           (0, start_pos, 0, 0))
    cache_v = jax.lax.dynamic_update_slice(cache_v, v.astype(cache_v.dtype),
                                           (0, start_pos, 0, 0))
    keys = cache_k[:B, :start_pos + S].astype(q.dtype)
    values = cache_v[:B, :start_pos + S].astype(q.dtype)

    qh = q.transpose(0, 2, 1, 3)                  # (B, Hq, S, hd)
    kh = keys.transpose(0, 2, 1, 3)               # (B, Hkv, L, hd)
    vh = values.transpose(0, 2, 1, 3)
    attn = gqa_attention(qh, kh, vh, mask, n_rep=n_rep,
                         scale=1.0 / math.sqrt(hd))
    attn = attn.transpose(0, 2, 1, 3).reshape(B, S, hq * hd)

    # output projection with the residual add fused in
    h = linear_residual(x, attn, p["wo_t"])

    # ---- feed-forward branch: fused RMSNorm + SwiGLU + residual ------------
    out = swiglu_ffn(h, p["ffn_norm_w"], p["w13"], p["w2_t"], eps=p["eps"])
    return out, cache_k, cache_v


# ----------------------------------------------------------------------------
# Pure-JAX reference (mirrors the PyTorch module)
# ----------------------------------------------------------------------------
def transformer_block_ref(x, raw, n_heads, n_kv_heads, head_dim, eps,
                          start_pos, freqs_cos, freqs_sin, mask,
                          cache_k, cache_v):
    def _rms(z, w):
        zf = z.astype(jnp.float32)
        y = zf * jax.lax.rsqrt(jnp.mean(zf * zf, axis=-1, keepdims=True) + eps)
        return w * y.astype(z.dtype)

    B, S, _ = x.shape
    n_rep = n_heads // n_kv_heads
    xa = _rms(x, raw["attn_norm_w"])
    q = (xa @ raw["wq"].T).reshape(B, S, n_heads, head_dim)
    k = (xa @ raw["wk"].T).reshape(B, S, n_kv_heads, head_dim)
    v = (xa @ raw["wv"].T).reshape(B, S, n_kv_heads, head_dim)
    q = apply_rope(q, freqs_cos, freqs_sin)
    k = apply_rope(k, freqs_cos, freqs_sin)
    ck = jax.lax.dynamic_update_slice(cache_k, k, (0, start_pos, 0, 0))
    cv = jax.lax.dynamic_update_slice(cache_v, v, (0, start_pos, 0, 0))
    keys = jnp.repeat(ck[:B, :start_pos + S], n_rep, axis=2)
    values = jnp.repeat(cv[:B, :start_pos + S], n_rep, axis=2)
    qh = q.transpose(0, 2, 1, 3)
    kh = keys.transpose(0, 2, 1, 3)
    vh = values.transpose(0, 2, 1, 3)
    scores = jnp.einsum("bhsd,bhld->bhsl", qh, kh) / math.sqrt(head_dim)
    scores = jnp.where(mask[None, None, :, :] == 0, -jnp.inf, scores)
    probs = jax.nn.softmax(scores.astype(jnp.float32), axis=-1).astype(qh.dtype)
    attn = jnp.einsum("bhsl,bhld->bhsd", probs, vh)
    attn = attn.transpose(0, 2, 1, 3).reshape(B, S, n_heads * head_dim)
    h = x + attn @ raw["wo"].T
    hn = _rms(h, raw["ffn_norm_w"])
    h1 = hn @ raw["w1"].T
    gated = (h1 * jax.nn.sigmoid(h1)) * (hn @ raw["w3"].T)
    return h + gated @ raw["w2"].T, ck, cv


# ----------------------------------------------------------------------------
# demo / correctness check
# ----------------------------------------------------------------------------
if __name__ == "__main__":
    dim = 128
    n_heads = 4
    n_kv_heads = 2
    multiple_of = 128
    head_dim = dim // n_heads                      # 32
    d_ff = _llama_d_ff(dim, multiple_of)           # 384
    eps = 1e-8
    batch, seq = 2, 8
    max_batch, max_seq = 2, 16
    start_pos = 0

    key = jax.random.PRNGKey(0)
    ks = jax.random.split(key, 10)

    def w_init(k, shape, fan_in):
        return jax.random.normal(k, shape, jnp.float32) / math.sqrt(fan_in)

    raw = dict(
        wq=w_init(ks[0], (n_heads * head_dim, dim), dim),
        wk=w_init(ks[1], (n_kv_heads * head_dim, dim), dim),
        wv=w_init(ks[2], (n_kv_heads * head_dim, dim), dim),
        wo=w_init(ks[3], (dim, n_heads * head_dim), n_heads * head_dim),
        w1=w_init(ks[4], (d_ff, dim), dim),
        w2=w_init(ks[5], (dim, d_ff), d_ff),
        w3=w_init(ks[6], (d_ff, dim), dim),
        attn_norm_w=1.0 + 0.1 * jax.random.normal(ks[7], (dim,), jnp.float32),
        ffn_norm_w=1.0 + 0.1 * jax.random.normal(ks[8], (dim,), jnp.float32),
    )
    x = jax.random.normal(ks[9], (batch, seq, dim), jnp.float32)

    # RoPE frequencies (cos/sin of the complex freqs), positions [start_pos, start_pos+seq)
    theta = 1.0 / (10000.0 ** (jnp.arange(0, head_dim, 2, dtype=jnp.float32) / head_dim))
    t = jnp.arange(start_pos, start_pos + seq, dtype=jnp.float32)
    freqs = jnp.outer(t, theta)                    # (S, hd/2)
    freqs_cos, freqs_sin = jnp.cos(freqs), jnp.sin(freqs)

    # causal mask over the cached prefix + current chunk: 1 = attend, 0 = masked
    L = start_pos + seq
    row = jnp.arange(seq)[:, None]
    col = jnp.arange(L)[None, :]
    mask = (col <= (row + start_pos)).astype(jnp.float32)      # (S, L)

    cache_k = jnp.zeros((max_batch, max_seq, n_kv_heads, head_dim), jnp.float32)
    cache_v = jnp.zeros((max_batch, max_seq, n_kv_heads, head_dim), jnp.float32)

    params = init_block_params(raw, n_heads=n_heads, n_kv_heads=n_kv_heads,
                               head_dim=head_dim, eps=eps)

    out, new_ck, new_cv = transformer_block_forward(
        x, params, start_pos, freqs_cos, freqs_sin, mask, cache_k, cache_v)
    out = jax.block_until_ready(out)

    ref, ref_ck, ref_cv = transformer_block_ref(
        x, raw, n_heads, n_kv_heads, head_dim, eps,
        start_pos, freqs_cos, freqs_sin, mask, cache_k, cache_v)

    assert out.shape == ref.shape == (batch, seq, dim)
    err = float(jnp.max(jnp.abs(out - ref)))
    assert jnp.allclose(out, ref, atol=1e-2, rtol=1e-2), f"mismatch vs reference, max |err| = {err}"
    assert jnp.allclose(new_ck, ref_ck, atol=1e-5, rtol=1e-5)
    assert jnp.allclose(new_cv, ref_cv, atol=1e-5, rtol=1e-5)

    print("KERNEL_OK")
</pallas_src>

<mosaic_0001>
module attributes {stable_mosaic.version = 11 : i64} {
  func.func @_norm_matmul_kernel(%arg0: i32, %arg1: i32, %arg2: memref<16x128xf32, #tpu.memory_space<vmem>>, %arg3: memref<1x128xf32, #tpu.memory_space<vmem>>, %arg4: memref<128x256xf32, #tpu.memory_space<vmem>>, %arg5: memref<16x256xf32, #tpu.memory_space<vmem>>, %arg6: memref<16x128xf32, #tpu.memory_space<vmem>>) attributes {dimension_semantics = [#tpu.dimension_semantics<parallel>, #tpu.dimension_semantics<arbitrary>], iteration_bounds = array<i64: 1, 1>, scalar_prefetch = 0 : i64, scratch_operands = 1 : i64, tpu.core_type = #tpu.core_type<tc>, window_params = [{transform_indices = @transform_0, window_bounds = array<i64: 16, 128>}, {pipeline_mode = #tpu.pipeline_mode<synchronous>, transform_indices = @transform_1, window_bounds = array<i64: 1, 128>}, {transform_indices = @transform_2, window_bounds = array<i64: 128, 256>}, {transform_indices = @transform_3, window_bounds = array<i64: 16, 256>}]} {
    %c0_i32 = arith.constant 0 : i32
    %0 = arith.cmpi eq, %arg1, %c0_i32 : i32
    %1 = arith.extui %0 : i1 to i32
    %c0_i32_0 = arith.constant 0 : i32
    %2 = arith.cmpi ne, %1, %c0_i32_0 : i32
    scf.if %2 {
      %c0_6 = arith.constant 0 : index
      %c0_7 = arith.constant 0 : index
      %7 = vector.load %arg2[%c0_6, %c0_7] : memref<16x128xf32, #tpu.memory_space<vmem>>, vector<16x128xf32>
      %8 = arith.mulf %7, %7 : vector<16x128xf32>
      %cst_8 = arith.constant dense<0.000000e+00> : vector<16xf32>
      %9 = vector.multi_reduction <add>, %8, %cst_8 [1] : vector<16x128xf32> to vector<16xf32>
      %10 = vector.shape_cast %9 : vector<16xf32> to vector<16x1xf32>
      %cst_9 = arith.constant 1.280000e+02 : f32
      %11 = vector.broadcast %cst_9 : f32 to vector<16x1xf32>
      %12 = arith.divf %10, %11 : vector<16x1xf32>
      %cst_10 = arith.constant 9.99999993E-9 : f32
      %13 = vector.broadcast %cst_10 : f32 to vector<16x1xf32>
      %14 = arith.addf %12, %13 : vector<16x1xf32>
      %15 = math.rsqrt %14 : vector<16x1xf32>
      %16 = vector.broadcast %15 : vector<16x1xf32> to vector<16x128xf32>
      %17 = arith.mulf %7, %16 : vector<16x128xf32>
      %c0_11 = arith.constant 0 : index
      %c0_12 = arith.constant 0 : index
      %18 = vector.load %arg3[%c0_11, %c0_12] : memref<1x128xf32, #tpu.memory_space<vmem>>, vector<1x128xf32>
      %19 = vector.broadcast %18 : vector<1x128xf32> to vector<16x128xf32>
      %20 = arith.mulf %17, %19 : vector<16x128xf32>
      %c0_13 = arith.constant 0 : index
      %c0_14 = arith.constant 0 : index
      %21 = vector.load %arg6[%c0_13, %c0_14] : memref<16x128xf32, #tpu.memory_space<vmem>>, vector<16x128xf32>
      tpu.vector_store %arg6[%c0_13, %c0_14], %20 {strides = array<i32>} : memref<16x128xf32, #tpu.memory_space<vmem>>, vector<16x128xf32>,
    } else {
    }
    %c0 = arith.constant 0 : index
    %c0_1 = arith.constant 0 : index
    %3 = vector.load %arg6[%c0, %c0_1] : memref<16x128xf32, #tpu.memory_space<vmem>>, vector<16x128xf32>
    %c0_2 = arith.constant 0 : index
    %c0_3 = arith.constant 0 : index
    %4 = vector.load %arg4[%c0_2, %c0_3] : memref<128x256xf32, #tpu.memory_space<vmem>>, vector<128x256xf32>
    %cst = arith.constant dense<0.000000e+00> : vector<16x256xf32>
    %5 = tpu.matmul %3, %4, %cst {dimension_numbers = #tpu.dot_dimension_numbers<[1], [0], [0], [1], [0, 0, 1, 1], [], []>} : vector<16x128xf32>, vector<128x256xf32>, vector<16x256xf32> -> vector<16x256xf32>
    %c0_4 = arith.constant 0 : index
    %c0_5 = arith.constant 0 : index
    %6 = vector.load %arg5[%c0_4, %c0_5] : memref<16x256xf32, #tpu.memory_space<vmem>>, vector<16x256xf32>
    tpu.vector_store %arg5[%c0_4, %c0_5], %5 {strides = array<i32>} : memref<16x256xf32, #tpu.memory_space<vmem>>, vector<16x256xf32>,
    return
  }
  func.func @transform_0(%arg0: i32, %arg1: i32) -> (i32, i32) {
    %c0_i32 = arith.constant 0 : i32
    %c0_i32_0 = arith.constant 0 : i32
    return %arg0, %c0_i32 : i32, i32
  }
  func.func @transform_1(%arg0: i32, %arg1: i32) -> (i32, i32) {
    %c0_i32 = arith.constant 0 : i32
    %c0_i32_0 = arith.constant 0 : i32
    %c0_i32_1 = arith.constant 0 : i32
    return %c0_i32, %c0_i32_0 : i32, i32
  }
  func.func @transform_2(%arg0: i32, %arg1: i32) -> (i32, i32) {
    %c0_i32 = arith.constant 0 : i32
    %c0_i32_0 = arith.constant 0 : i32
    return %c0_i32, %arg1 : i32, i32
  }
  func.func @transform_3(%arg0: i32, %arg1: i32) -> (i32, i32) {
    %c0_i32 = arith.constant 0 : i32
    return %arg0, %arg1 : i32, i32
  }
}

</mosaic_0001>

<llo_original>
// kernel: tpu_custom_call.1
$region0: #{tpu_custom_call.1}
  #allocation0 [shape = 'u32[]', space=smem, size = 0x4, offset = 0x4, fixed_abs, tag = 'smem constant byte address 0x4 - core index']
  #allocation1 [shape = 'u32[144,128]{1,0:T(1,128)}', space=vmem, size = 0x12000, scoped, tag = 'internal scratch']
  #allocation2 [shape = 'f32[16,128]{1,0:T(8,128)}', space=vmem, size = 0x2000, scoped, tag = 'scratch operand']
  %s0 = inlined_call_operand.hbm [shape: f32[16,128], index: 0, kind: input, shape index: {}]
  %s1 = inlined_call_operand.vmem [shape: f32[1,128], index: 1, kind: input, shape index: {}]
  %s2 = inlined_call_operand.hbm [shape: f32[128,256], index: 2, kind: input, shape index: {}]
  %s3 = inlined_call_operand.hbm [shape: f32[16,256], index: 3, kind: output, shape index: {}]
  %s4 = sld [smem:[#allocation0]]
  $region34: #{tpu_custom_call.1} parent=0
    _
  %s6 = ssub.s32 1, %s4
  %s7 = scalar_select 0, %s6, %s4
  $region1: #{tpu_custom_call.1} parent=0
    #allocation3 [shape = 'u8[8192]{0}', space=vmem, size = 0x2000, scoped, tag = 'input window, operand 0, single buffered']
    #allocation4 [shape = 's32[1]{0}', space=sflag, size = 0x4, scoped, tag = 'scoped memory for tpu_custom_call.1']
    #allocation5 [shape = 's32[1]{0}', space=sflag, size = 0x4, scoped, tag = 'scoped memory for tpu_custom_call.1']
    #allocation6 [shape = 'u8[131072]{0}', space=vmem, size = 0x20000, scoped, tag = 'input window, operand 2, single buffered']
    #allocation7 [shape = 's32[1]{0}', space=sflag, size = 0x4, scoped, tag = 'scoped memory for tpu_custom_call.1']
    #allocation8 [shape = 'u8[16384]{0}', space=vmem, size = 0x4000, scoped, tag = 'output window, operand 0, single buffered']
    %8 = vsyncpa [#allocation4], 0
    %9 = vsyncpa [#allocation7], 0
    %10 = vsyncpa [#allocation5], 0
    // Predicated region
    $region2: #{tpu_custom_call.1} parent=1 // pred_check
      _
    $region3: #{tpu_custom_call.1} parent=1 // pred_check_branch
      %12 = sbr.rel (0) target = $region5
    $region4: #{tpu_custom_call.1} parent=1 // pred_region
      %s14 = ssub.s32 256, 256
      %15 = vsyncadd [#allocation4], %s14
      %s16 = sshll.u32 [#allocation3], 4
      %s17 = int_to_ptr.vmem [resolvable:$true] %s16
      %22 = dma.hbm_to_vmem [thread:$0]  %s0, 256, %s17, [#allocation4], 128, 128, 8
    $region5: #{tpu_custom_call.1} parent=1 // pred_fallthru
      _
    // Predicated region
    $region6: #{tpu_custom_call.1} parent=1 // pred_check
      _
    $region7: #{tpu_custom_call.1} parent=1 // pred_check_branch
      %24 = sbr.rel (0) target = $region9
    $region8: #{tpu_custom_call.1} parent=1 // pred_region
      _
    $region9: #{tpu_custom_call.1} parent=1 // pred_fallthru
      _
    // Predicated region
    $region10: #{tpu_custom_call.1} parent=1 // pred_check
      _
    $region11: #{tpu_custom_call.1} parent=1 // pred_check_branch
      %26 = sbr.rel (0) target = $region13
    $region12: #{tpu_custom_call.1} parent=1 // pred_region
      %s28 = ssub.s32 4096, 4096
      %29 = vsyncadd [#allocation7], %s28
      %s30 = sshll.u32 [#allocation6], 4
      %s31 = int_to_ptr.vmem [resolvable:$true] %s30
      %36 = dma.hbm_to_vmem [thread:$0]  %s2, 4096, %s31, [#allocation7], 256, 256, 16
    $region13: #{tpu_custom_call.1} parent=1 // pred_fallthru
      _
    // Predicated region
    $region14: #{tpu_custom_call.1} parent=1 // pred_check
      _
    $region15: #{tpu_custom_call.1} parent=1 // pred_check_branch
      %38 = sbr.rel (0) target = $region17
    $region16: #{tpu_custom_call.1} parent=1 // pred_region
      %39 = dma.done [#allocation4], 256
    $region17: #{tpu_custom_call.1} parent=1 // pred_fallthru
      _
    // Predicated region
    $region18: #{tpu_custom_call.1} parent=1 // pred_check
      _
    $region19: #{tpu_custom_call.1} parent=1 // pred_check_branch
      %41 = sbr.rel (0) target = $region21
    $region20: #{tpu_custom_call.1} parent=1 // pred_region
      %42 = dma.done [#allocation7], 4096
    $region21: #{tpu_custom_call.1} parent=1 // pred_fallthru
      _
    %p43 = scmp.eq.s32.totalorder 0, 0
    // Predicated region
    $region22: #{tpu_custom_call.1} parent=1 // pred_check
      %p44 = pneg %p43
    $region23: #{tpu_custom_call.1} parent=1 // pred_check_branch
      %46 = sbr.rel (%p44) target = $region25
    $region24: #{tpu_custom_call.1} parent=1 // pred_region
      %v47 = vld [vmem:[#allocation3] sm:$0xff]
      %v48 = vld [vmem:[#allocation3 + $0x8] sm:$0xff]
      %v49 = vmul.f32 %v47, %v47
      %v50 = vmul.f32 %v48, %v48
      %51 = vadd.xlane.f32.xlu0 %v49
      %v52 = vpop.xlane.xlu0 %51
      %53 = vadd.xlane.f32.xlu0 %v50
      %v54 = vpop.xlane.xlu0 %53
      %v55 = vrcp.pop 128.0
      %v56 = vmul.f32 %v52, %v55
      %v57 = vmul.f32 %v54, %v55
      %v58 = vadd.f32 %v56, 1e-08
      %v59 = vadd.f32 %v57, 1e-08
      %v60 = vrsqrt.pop %v58
      %v61 = vrsqrt.pop %v59
      %v62 = vmul.f32 %v47, %v60
      %v63 = vmul.f32 %v48, %v61
      %v64 = vld [vmem:[%s1] sm:$0x1]
      %v66 = vlaneseq
      %v67 = vshrl.u32 %v66, 7
      %v68 = vsub.s32 0, %v67
      %v69 = vrot.slane %v64, %v68
      %v71 = vmul.f32 %v62, %v69
      %v72 = vmul.f32 %v63, %v69
      %73 = vst [vmem:[#allocation2] sm:$0xff] %v71
      %74 = vst [vmem:[#allocation2 + $0x8] sm:$0xff] %v72
    $region25: #{tpu_custom_call.1} parent=1 // pred_fallthru
      _
    %v75 = vld [vmem:[#allocation2] sm:$0xff]
    %v76 = vld [vmem:[#allocation2 + $0x8] sm:$0xff]
    %v77 = vld [vmem:[#allocation6] sm:$0xff]
    %v78 = vld [vmem:[#allocation6 + $0x8] sm:$0xff]
    %v79 = vld [vmem:[#allocation6 + $0x10] sm:$0xff]
    %v80 = vld [vmem:[#allocation6 + $0x18] sm:$0xff]
    %v81 = vld [vmem:[#allocation6 + $0x20] sm:$0xff]
    %v82 = vld [vmem:[#allocation6 + $0x28] sm:$0xff]
    %v83 = vld [vmem:[#allocation6 + $0x30] sm:$0xff]
    %v84 = vld [vmem:[#allocation6 + $0x38] sm:$0xff]
    %v85 = vld [vmem:[#allocation6 + $0x40] sm:$0xff]
    %v86 = vld [vmem:[#allocation6 + $0x48] sm:$0xff]
    %v87 = vld [vmem:[#allocation6 + $0x50] sm:$0xff]
    %v88 = vld [vmem:[#allocation6 + $0x58] sm:$0xff]
    %v89 = vld [vmem:[#allocation6 + $0x60] sm:$0xff]
    %v90 = vld [vmem:[#allocation6 + $0x68] sm:$0xff]
    %v91 = vld [vmem:[#allocation6 + $0x70] sm:$0xff]
    %v92 = vld [vmem:[#allocation6 + $0x78] sm:$0xff]
    %v93 = vld [vmem:[#allocation6 + $0x80] sm:$0xff]
    %v94 = vld [vmem:[#allocation6 + $0x88] sm:$0xff]
    %v95 = vld [vmem:[#allocation6 + $0x90] sm:$0xff]
    %v96 = vld [vmem:[#allocation6 + $0x98] sm:$0xff]
    %v97 = vld [vmem:[#allocation6 + $0xa0] sm:$0xff]
    %v98 = vld [vmem:[#allocation6 + $0xa8] sm:$0xff]
    %v99 = vld [vmem:[#allocation6 + $0xb0] sm:$0xff]
    %v100 = vld [vmem:[#allocation6 + $0xb8] sm:$0xff]
    %v101 = vld [vmem:[#allocation6 + $0xc0] sm:$0xff]
    %v102 = vld [vmem:[#allocation6 + $0xc8] sm:$0xff]
    %v103 = vld [vmem:[#allocation6 + $0xd0] sm:$0xff]
    %v104 = vld [vmem:[#allocation6 + $0xd8] sm:$0xff]
    %v105 = vld [vmem:[#allocation6 + $0xe0] sm:$0xff]
    %v106 = vld [vmem:[#allocation6 + $0xe8] sm:$0xff]
    %v107 = vld [vmem:[#allocation6 + $0xf0] sm:$0xff]
    %v108 = vld [vmem:[#allocation6 + $0xf8] sm:$0xff]
    %109 = vmatprep.subr.mxu0 %v78
    %110 = vmatpush1.msra.mxu0 %v77
    %111 = vmatprep.subr.mxu0 %v80
    %112 = vmatpush1.msra.mxu0 %v79
    %113 = vmatprep.subr.mxu0 %v82
    %114 = vmatpush1.msra.mxu0 %v81
    %115 = vmatprep.subr.mxu0 %v84
    %116 = vmatpush1.msra.mxu0 %v83
    %117 = vmatprep.subr.mxu0 %v86
    %118 = vmatpush1.msra.mxu0 %v85
    %119 = vmatprep.subr.mxu0 %v88
    %120 = vmatpush1.msra.mxu0 %v87
    %121 = vmatprep.subr.mxu0 %v90
    %122 = vmatpush1.msra.mxu0 %v89
    %123 = vmatprep.subr.mxu0 %v92
    %124 = vmatpush1.msra.mxu0 %v91
    %125 = vmatprep.subr.mxu0 %v94
    %126 = vmatpush1.msra.mxu0 %v93
    %127 = vmatprep.subr.mxu0 %v96
    %128 = vmatpush1.msra.mxu0 %v95
    %129 = vmatprep.subr.mxu0 %v98
    %130 = vmatpush1.msra.mxu0 %v97
    %131 = vmatprep.subr.mxu0 %v100
    %132 = vmatpush1.msra.mxu0 %v99
    %133 = vmatprep.subr.mxu0 %v102
    %134 = vmatpush1.msra.mxu0 %v101
    %135 = vmatprep.subr.mxu0 %v104
    %136 = vmatpush1.msra.mxu0 %v103
    %137 = vmatprep.subr.mxu0 %v106
    %138 = vmatpush1.msra.mxu0 %v105
    %139 = vmatprep.subr.mxu0 %v108
    %140 = vmatpush1.msra.mxu0 %v107
    %141 = vmatprep.subr.mxu0 0.0
    %142 = vmatpush1.msra.mxu0 0.0
    %143 = vmatprep.subr.mxu0 0.0
    %144 = vmatpush1.msra.mxu0 0.0
    %145 = vmatprep.subr.mxu0 0.0
    %146 = vmatpush1.msra.mxu0 0.0
    %147 = vmatprep.subr.mxu0 0.0
    %148 = vmatpush1.msra.mxu0 0.0
    %149 = vmatprep.subr.mxu0 0.0
    %150 = vmatpush1.msra.mxu0 0.0
    %151 = vmatprep.subr.mxu0 0.0
    %152 = vmatpush1.msra.mxu0 0.0
    %153 = vmatprep.subr.mxu0 0.0
    %154 = vmatpush1.msra.mxu0 0.0
    %155 = vmatprep.subr.mxu0 0.0
    %156 = vmatpush1.msra.mxu0 0.0
    %157 = vmatprep.subr.mxu0 0.0
    %158 = vmatpush1.msra.mxu0 0.0
    %159 = vmatprep.subr.mxu0 0.0
    %160 = vmatpush1.msra.mxu0 0.0
    %161 = vmatprep.subr.mxu0 0.0
    %162 = vmatpush1.msra.mxu0 0.0
    %163 = vmatprep.subr.mxu0 0.0
    %164 = vmatpush1.msra.mxu0 0.0
    %165 = vmatprep.subr.mxu0 0.0
    %166 = vmatpush1.msra.mxu0 0.0
    %167 = vmatprep.subr.mxu0 0.0
    %168 = vmatpush1.msra.mxu0 0.0
    %169 = vmatprep.subr.mxu0 0.0
    %170 = vmatpush1.msra.mxu0 0.0
    %171 = vmatprep.subr.mxu0 0.0
    %172 = vmatpush1.msra.mxu0 0.0
    %173 = vmatprep.mubr.f32.mxu0 0.0
    %174 = vmatmul.mubr.f32.gmra.mrb[0].mxu0 %v75
    %v175 = vpop.f32.mrb[0].mxu0
    %v176 = vadd.f32 0.0, %v175
    %v177 = vpop.f32.mrb[0].mxu0
    %v178 = vadd.f32 0.0, %v177
    %179 = vmatprep.mubr.f32.mxu0 0.0
    %180 = vmatmul.mubr.f32.gmra.mrb[0].mxu0 %v76
    %v181 = vpop.f32.mrb[0].mxu0
    %v182 = vadd.f32 0.0, %v181
    %v183 = vpop.f32.mrb[0].mxu0
    %v184 = vadd.f32 0.0, %v183
    %185 = vdwg.mxu0
    %186 = vst [vmem:[#allocation8] sm:$0xff] %v176
    %187 = vst [vmem:[#allocation8 + $0x8] sm:$0xff] %v178
    %188 = vst [vmem:[#allocation8 + $0x10] sm:$0xff] %v182
    %189 = vst [vmem:[#allocation8 + $0x18] sm:$0xff] %v184
    // Predicated region
    $region26: #{tpu_custom_call.1} parent=1 // pred_check
      _
    $region27: #{tpu_custom_call.1} parent=1 // pred_check_branch
      %191 = sbr.rel (0) target = $region29
    $region28: #{tpu_custom_call.1} parent=1 // pred_region
      %s193 = ssub.s32 512, 512
      %194 = vsyncadd [#allocation5], %s193
      %s195 = sshll.u32 [#allocation8], 4
      %s196 = int_to_ptr.vmem [resolvable:$true] %s195
      %201 = dma.vmem_to_hbm [thread:$0]  %s196, 512, %s3, [#allocation5], 256, 256, 16
    $region29: #{tpu_custom_call.1} parent=1 // pred_fallthru
      _
    // Predicated region
    $region30: #{tpu_custom_call.1} parent=1 // pred_check
      _
    $region31: #{tpu_custom_call.1} parent=1 // pred_check_branch
      %203 = sbr.rel (0) target = $region33
    $region32: #{tpu_custom_call.1} parent=1 // pred_region
      %204 = dma.done [#allocation5], 512
    $region33: #{tpu_custom_call.1} parent=1 // pred_fallthru
      _
    %205 = vsyncpa [#allocation4], 1
    %206 = vsyncpa [#allocation7], 1
    %207 = vsyncpa [#allocation5], 1

</llo_original>
